<compile_context>
chip_gen: v7x
topology: tpu7x:2x2x1
jax: 0.10.0
libtpu: 0.0.40
codegen_flags: <defaults>
</compile_context>

<pallas_src>
import jax
import jax.numpy as jnp
from jax.experimental import pallas as pl
from jax.experimental.pallas import tpu as pltpu


def se_kernel(x_ref, w1_ref, w2_ref, o_ref):
    # x_ref: (TB, HW, C) channels-last; w1_ref: (C, Cr) f32 (= W1.T); w2_ref: (Cr, C) f32 (= W2.T)
    x = x_ref[...]                                    # input dtype, (TB, HW, C)
    hw = x.shape[1]

    # squeeze: global average / max pool over the spatial (sublane) axis.
    # HW is always the FULL middle dim (never tiled) -> no masking / divisor fixup.
    # Accumulate in f32 without materializing an f32 copy of the whole tile.
    y_avg = jnp.sum(x, axis=1, dtype=jnp.float32) * (1.0 / float(hw))   # (TB, C)
    y_max = jnp.max(x, axis=1).astype(jnp.float32)                      # (TB, C)

    # Run both branches through the shared FC in one pass: stack to (2*TB, C)
    # so w1/w2 are pushed to the MXU once and ReLU/sigmoid EUP work is batched.
    y = jnp.concatenate([y_avg, y_max], axis=0)                         # (2*TB, C)
    h1 = jnp.maximum(
        jnp.dot(y, w1_ref[...], preferred_element_type=jnp.float32), 0.0)
    z = jax.nn.sigmoid(
        jnp.dot(h1, w2_ref[...], preferred_element_type=jnp.float32))   # (2*TB, C)

    tb = x.shape[0]
    scale = (z[:tb] + z[tb:]).astype(x.dtype)                           # (TB, C)

    # excite: C is on lanes, so the gate broadcast over HW is a cheap sublane
    # broadcast and the store is lane-dense (unmasked vst for C % 128 == 0).
    o_ref[...] = (x * scale[:, None, :]).astype(o_ref.dtype)


def _vmem_budget():
    """(per-tile byte budget, vmem_limit_bytes) tuned per TPU generation."""
    try:
        kind = jax.devices()[0].device_kind.lower()
    except Exception:
        kind = ""
    if "v5" in kind or "v6" in kind:
        # 128 MiB physical VMEM: 2x(in)+2x(out) double-buffered ~14 MiB tiles
        # (+ weights + small FC intermediates) fits comfortably under 96 MiB.
        return 14 * 1024 * 1024, 96 * 1024 * 1024
    # v7x (64 MiB / TC) or unknown: stay conservative.
    return 8 * 1024 * 1024, 48 * 1024 * 1024


def _choose_tb(B, C, HW, itemsize, tile_budget_bytes):
    """Pick TB: fits the per-tile byte budget; prefer >=2 (even) grid steps for
    v7x's two TensorCores and sublane-aligned (multiple-of-8) TB for the
    (2*TB, C) concat/split; then as large as possible."""
    divisors = [d for d in range(1, B + 1) if B % d == 0]
    fitting = [d for d in divisors if d * C * HW * itemsize <= tile_budget_bytes]
    if not fitting:
        return 1

    def rank(d):
        nb = B // d
        return (nb >= 2, nb % 2 == 0, d % 8 == 0, d)

    return max(fitting, key=rank)


def se_layer(x_nchw, w1_t, w2_t, tb=None):
    """x_nchw: (B, C, H, W), w1_t: (C, Cr), w2_t: (Cr, C). Returns (B, C, H, W)."""
    B, C, H, W = x_nchw.shape
    # MaxPool2d(kernel_size=7, stride=7).view(b, c) only works for a 1x1 pool
    # output, i.e. H == W == 7 -> global spatial max. Fail loudly otherwise.
    assert H == 7 and W == 7, "SELayer max-pool branch requires H == W == 7"
    HW = H * W
    Cr = w1_t.shape[1]
    itemsize = jnp.dtype(x_nchw.dtype).itemsize

    # Channels-last working layout: put C on the lane axis. This is layout
    # plumbing in the wrapper (cheap XLA transpose), not compute hoisting.
    x3 = jnp.transpose(x_nchw, (0, 2, 3, 1)).reshape(B, HW, C)

    tile_budget_bytes, vmem_limit_bytes = _vmem_budget()
    if tb is None:
        tb = _choose_tb(B, C, HW, itemsize, tile_budget_bytes)
    assert B % tb == 0, "tb must divide B"
    nb = B // tb

    cost = pl.CostEstimate(
        flops=2 * (2 * B) * C * Cr            # FC1
        + 2 * (2 * B) * Cr * C                # FC2
        + 3 * B * C * HW,                     # avg + max reductions + excite mul
        transcendentals=2 * B * C,            # sigmoid (both branches)
        bytes_accessed=2 * B * C * HW * itemsize + (C * Cr + Cr * C) * 4,
    )

    out3 = pl.pallas_call(
        se_kernel,
        out_shape=jax.ShapeDtypeStruct((B, HW, C), x_nchw.dtype),
        grid_spec=pltpu.PrefetchScalarGridSpec(
            num_scalar_prefetch=0,
            grid=(nb,),
            in_specs=[
                # x: tile over batch only; HW and C stay full array dims (so the
                # (8,128) divisibility rule is satisfied for any C/HW).
                pl.BlockSpec((tb, HW, C), lambda b: (b, 0, 0)),
                pl.BlockSpec((C, Cr), lambda b: (0, 0)),
                pl.BlockSpec((Cr, C), lambda b: (0, 0)),
            ],
            out_specs=pl.BlockSpec((tb, HW, C), lambda b: (b, 0, 0)),
        ),
        compiler_params=pltpu.CompilerParams(
            # Independent batch tiles: shard across v7x's 2 TCs; harmless elsewhere.
            dimension_semantics=("parallel",),
            vmem_limit_bytes=vmem_limit_bytes,
        ),
        cost_estimate=cost,
    )(x3, w1_t, w2_t)

    return jnp.transpose(out3.reshape(B, H, W, C), (0, 3, 1, 2))
    # TODO(synk): if the surrounding model already runs channels-last (NHWC),
    # drop the two wrapper transposes and feed (B, HW, C) directly.


def reference(x_nchw, w1_t, w2_t):
    """Pure-JAX reference mirroring the PyTorch forward (H = W = 7)."""
    y_avg = jnp.mean(x_nchw, axis=(2, 3))             # AdaptiveAvgPool2d(1)
    y_max = jnp.max(x_nchw, axis=(2, 3))              # MaxPool2d(7, 7) on 7x7 input

    def fc(y):
        h1 = jnp.maximum(y @ w1_t, 0.0)
        return jax.nn.sigmoid(h1 @ w2_t)

    scale = (fc(y_avg) + fc(y_max))[:, :, None, None]
    return x_nchw * scale


if __name__ == "__main__":
    key = jax.random.PRNGKey(0)
    B, C, H, W = 4, 8, 7, 7        # MaxPool2d(7,7) -> 1x1 requires H=W=7
    reduction = 1
    Cr = C // reduction

    kx, k1, k2 = jax.random.split(key, 3)
    x = jax.random.normal(kx, (B, C, H, W), dtype=jnp.float32)

    # torch Linear(channel, channel//r, bias=False).weight has shape (Cr, C);
    # we store the transposed matrices so the kernel does y @ W.T directly.
    w1_t = jax.random.normal(k1, (C, Cr), dtype=jnp.float32) * 0.1   # = W1.T
    w2_t = jax.random.normal(k2, (Cr, C), dtype=jnp.float32) * 0.1   # = W2.T

    # tb=2 -> grid of 2 steps, exercising the batch-tiled pipeline even at toy size.
    out = se_layer(x, w1_t, w2_t, tb=2)
    out = jax.block_until_ready(out)

    ref = reference(x, w1_t, w2_t)
    assert out.shape == (B, C, H, W)
    assert jnp.allclose(out, ref, atol=1e-5, rtol=1e-5), "mismatch vs reference"

    print("KERNEL_OK")
</pallas_src>

<mosaic_0001>
module attributes {stable_mosaic.version = 11 : i64} {
  func.func @se_kernel(%arg0: i32, %arg1: memref<2x49x8xf32, #tpu.memory_space<vmem>>, %arg2: memref<8x8xf32, #tpu.memory_space<vmem>>, %arg3: memref<8x8xf32, #tpu.memory_space<vmem>>, %arg4: memref<2x49x8xf32, #tpu.memory_space<vmem>>) attributes {dimension_semantics = [#tpu.dimension_semantics<parallel>], iteration_bounds = array<i64: 2>, scalar_prefetch = 0 : i64, scratch_operands = 0 : i64, tpu.core_type = #tpu.core_type<tc>, window_params = [{transform_indices = @transform_0, window_bounds = array<i64: 2, 49, 8>}, {pipeline_mode = #tpu.pipeline_mode<synchronous>, transform_indices = @transform_1, window_bounds = array<i64: 8, 8>}, {pipeline_mode = #tpu.pipeline_mode<synchronous>, transform_indices = @transform_2, window_bounds = array<i64: 8, 8>}, {transform_indices = @transform_3, window_bounds = array<i64: 2, 49, 8>}]} {
    %c0 = arith.constant 0 : index
    %c0_0 = arith.constant 0 : index
    %c0_1 = arith.constant 0 : index
    %0 = vector.load %arg1[%c0, %c0_0, %c0_1] : memref<2x49x8xf32, #tpu.memory_space<vmem>>, vector<2x49x8xf32>
    %cst = arith.constant dense<0.000000e+00> : vector<2x8xf32>
    %1 = vector.multi_reduction <add>, %0, %cst [1] : vector<2x49x8xf32> to vector<2x8xf32>
    %cst_2 = arith.constant 0.0204081628 : f32
    %2 = vector.broadcast %cst_2 : f32 to vector<2x8xf32>
    %3 = arith.mulf %1, %2 : vector<2x8xf32>
    %cst_3 = arith.constant dense<0xFF800000> : vector<2x8xf32>
    %4 = vector.multi_reduction <maximumf>, %0, %cst_3 [1] : vector<2x49x8xf32> to vector<2x8xf32>
    %5 = tpu.concatenate %3, %4 in 0 : vector<2x8xf32>, vector<2x8xf32> -> vector<4x8xf32>
    %c0_4 = arith.constant 0 : index
    %c0_5 = arith.constant 0 : index
    %6 = vector.load %arg2[%c0_4, %c0_5] : memref<8x8xf32, #tpu.memory_space<vmem>>, vector<8x8xf32>
    %cst_6 = arith.constant dense<0.000000e+00> : vector<4x8xf32>
    %7 = tpu.matmul %5, %6, %cst_6 {dimension_numbers = #tpu.dot_dimension_numbers<[1], [0], [0], [1], [0, 0, 1, 1], [], []>} : vector<4x8xf32>, vector<8x8xf32>, vector<4x8xf32> -> vector<4x8xf32>
    %cst_7 = arith.constant 0.000000e+00 : f32
    %8 = vector.broadcast %cst_7 : f32 to vector<4x8xf32>
    %9 = arith.maximumf %7, %8 : vector<4x8xf32>
    %c0_8 = arith.constant 0 : index
    %c0_9 = arith.constant 0 : index
    %10 = vector.load %arg3[%c0_8, %c0_9] : memref<8x8xf32, #tpu.memory_space<vmem>>, vector<8x8xf32>
    %cst_10 = arith.constant dense<0.000000e+00> : vector<4x8xf32>
    %11 = tpu.matmul %9, %10, %cst_10 {dimension_numbers = #tpu.dot_dimension_numbers<[1], [0], [0], [1], [0, 0, 1, 1], [], []>} : vector<4x8xf32>, vector<8x8xf32>, vector<4x8xf32> -> vector<4x8xf32>
    %12 = arith.negf %11 : vector<4x8xf32>
    %13 = math.exp %12 : vector<4x8xf32>
    %cst_11 = arith.constant 1.000000e+00 : f32
    %14 = vector.broadcast %cst_11 : f32 to vector<4x8xf32>
    %15 = arith.addf %14, %13 : vector<4x8xf32>
    %16 = arith.divf %14, %15 : vector<4x8xf32>
    %17 = vector.extract_strided_slice %16 {offsets = [0, 0], sizes = [2, 8], strides = [1, 1]} : vector<4x8xf32> to vector<2x8xf32>
    %18 = vector.extract_strided_slice %16 {offsets = [2, 0], sizes = [2, 8], strides = [1, 1]} : vector<4x8xf32> to vector<2x8xf32>
    %19 = arith.addf %17, %18 : vector<2x8xf32>
    %20 = vector.shape_cast %19 : vector<2x8xf32> to vector<2x1x8xf32>
    %21 = vector.broadcast %20 : vector<2x1x8xf32> to vector<2x49x8xf32>
    %22 = arith.mulf %0, %21 : vector<2x49x8xf32>
    %c0_12 = arith.constant 0 : index
    %c0_13 = arith.constant 0 : index
    %c0_14 = arith.constant 0 : index
    %23 = vector.load %arg4[%c0_12, %c0_13, %c0_14] : memref<2x49x8xf32, #tpu.memory_space<vmem>>, vector<2x49x8xf32>
    tpu.vector_store %arg4[%c0_12, %c0_13, %c0_14], %22 {strides = array<i32>} : memref<2x49x8xf32, #tpu.memory_space<vmem>>, vector<2x49x8xf32>,
    return
  }
  func.func @transform_0(%arg0: i32) -> (i32, i32, i32) {
    %c0_i32 = arith.constant 0 : i32
    %c0_i32_0 = arith.constant 0 : i32
    %c0_i32_1 = arith.constant 0 : i32
    return %arg0, %c0_i32, %c0_i32_0 : i32, i32, i32
  }
  func.func @transform_1(%arg0: i32) -> (i32, i32) {
    %c0_i32 = arith.constant 0 : i32
    %c0_i32_0 = arith.constant 0 : i32
    %c0_i32_1 = arith.constant 0 : i32
    return %c0_i32, %c0_i32_0 : i32, i32
  }
  func.func @transform_2(%arg0: i32) -> (i32, i32) {
    %c0_i32 = arith.constant 0 : i32
    %c0_i32_0 = arith.constant 0 : i32
    %c0_i32_1 = arith.constant 0 : i32
    return %c0_i32, %c0_i32_0 : i32, i32
  }
  func.func @transform_3(%arg0: i32) -> (i32, i32, i32) {
    %c0_i32 = arith.constant 0 : i32
    %c0_i32_0 = arith.constant 0 : i32
    %c0_i32_1 = arith.constant 0 : i32
    return %arg0, %c0_i32, %c0_i32_0 : i32, i32, i32
  }
}

</mosaic_0001>

<llo_original>
// kernel: tpu_custom_call.1
$region0: #{tpu_custom_call.1}
  #allocation0 [shape = 'u32[]', space=smem, size = 0x4, offset = 0x4, fixed_abs, tag = 'smem constant byte address 0x4 - core index']
  #allocation1 [shape = 'u32[144,128]{1,0:T(1,128)}', space=vmem, size = 0x12000, scoped, tag = 'internal scratch']
  %s0 = inlined_call_operand.vmem [shape: f32[4,49,8], index: 0, kind: input, shape index: {}]
  %s1 = inlined_call_operand.vmem [shape: f32[8,8], index: 1, kind: input, shape index: {}]
  %s2 = inlined_call_operand.vmem [shape: f32[8,8], index: 2, kind: input, shape index: {}]
  %s3 = inlined_call_operand.vmem [shape: f32[4,49,8], index: 3, kind: output, shape index: {}]
  %s4 = sld [smem:[#allocation0]]
  $region45: #{tpu_custom_call.1} parent=0
    _
  %s6 = ssub.s32 1, %s4
  %s7 = scalar_select 0, %s6, %s4
  loop: start=0, step=1, limit=4
  $region2: #{tpu_custom_call.1} parent=0 // loop_pre_header
    _
  $region3: #{tpu_custom_call.1} parent=0 // loop_header
    %s9 = sphi 0, %s13
    %p10 = scmp.ge.s32.totalorder %s9, 4
    %s19 = sphi 0, %s21
    %s22 = sphi 0, %s19
    %s23 = sphi 0, %s22
    %s39 = sphi 0, %s23
    %s43 = sphi 0, %s43
    %s45 = sphi 0, %s43
    %s46 = sphi 0, %s45
    %s60 = sphi 0, %s46
    %s64 = sphi 0, %s64
    %s66 = sphi 0, %s64
    %s67 = sphi 0, %s66
    %s81 = sphi 0, %s67
    %s87 = sphi 0, %s89
    %s90 = sphi 0, %s87
    %s91 = sphi 0, %s90
    %s107 = sphi 0, %s91
  $region4: #{tpu_custom_call.1} parent=0 // loop_header_branch
    %12 = sbr.rel (%p10) target = $region8
  $region5: #{tpu_custom_call.1} parent=0 // loop_body
    %s14 = ssub.s32 %s9, 1
    %s15 = ssub.s32 %s9, 2
    %s16 = sadd.s32 %s9, 1
    %s17 = ssub.s32 %s9, %s16
    %p18 = scmp.eq.s32.totalorder %s17, 0
    %s20 = sadd.s32 %s19, 1
    %s21 = scalar_select %p18, %s19, %s20
    %p24 = pneg %p18
    %p25 = scmp.eq.s32.totalorder %s9, 1
    %p26 = por %p24, %p25
    %p27 = scmp.ne.s32.totalorder %s19, %s22
    %p28 = scmp.eq.s32.totalorder %s9, 0
    %p29 = por %p27, %p28
    %p30 = scmp.ne.s32.totalorder %s19, %s22
    %p31 = scmp.eq.s32.totalorder %s14, 1
    %p32 = por %p30, %p31
    %p33 = scmp.ne.s32.totalorder %s22, %s23
    %p34 = scmp.eq.s32.totalorder %s14, 0
    %p35 = por %p33, %p34
    %p36 = scmp.ne.s32.totalorder %s22, %s23
    %p37 = scmp.eq.s32.totalorder %s15, 1
    %p38 = por %p36, %p37
    %p40 = scmp.ne.s32.totalorder %s23, %s39
    %p41 = scmp.eq.s32.totalorder %s15, 0
    %p42 = por %p40, %p41
    %s44 = sadd.s32 %s43, 1
    %p47 = scmp.eq.s32.totalorder %s9, 1
    %p48 = scmp.ne.s32.totalorder %s43, %s45
    %p49 = scmp.eq.s32.totalorder %s9, 0
    %p50 = por %p48, %p49
    %p51 = scmp.ne.s32.totalorder %s43, %s45
    %p52 = scmp.eq.s32.totalorder %s14, 1
    %p53 = por %p51, %p52
    %p54 = scmp.ne.s32.totalorder %s45, %s46
    %p55 = scmp.eq.s32.totalorder %s14, 0
    %p56 = por %p54, %p55
    %p57 = scmp.ne.s32.totalorder %s45, %s46
    %p58 = scmp.eq.s32.totalorder %s15, 1
    %p59 = por %p57, %p58
    %p61 = scmp.ne.s32.totalorder %s46, %s60
    %p62 = scmp.eq.s32.totalorder %s15, 0
    %p63 = por %p61, %p62
    %s65 = sadd.s32 %s64, 1
    %p68 = scmp.eq.s32.totalorder %s9, 1
    %p69 = scmp.ne.s32.totalorder %s64, %s66
    %p70 = scmp.eq.s32.totalorder %s9, 0
    %p71 = por %p69, %p70
    %p72 = scmp.ne.s32.totalorder %s64, %s66
    %p73 = scmp.eq.s32.totalorder %s14, 1
    %p74 = por %p72, %p73
    %p75 = scmp.ne.s32.totalorder %s66, %s67
    %p76 = scmp.eq.s32.totalorder %s14, 0
    %p77 = por %p75, %p76
    %p78 = scmp.ne.s32.totalorder %s66, %s67
    %p79 = scmp.eq.s32.totalorder %s15, 1
    %p80 = por %p78, %p79
    %p82 = scmp.ne.s32.totalorder %s67, %s81
    %p83 = scmp.eq.s32.totalorder %s15, 0
    %p84 = por %p82, %p83
    %s85 = ssub.s32 %s9, %s16
    %p86 = scmp.eq.s32.totalorder %s85, 0
    %s88 = sadd.s32 %s87, 1
    %s89 = scalar_select %p86, %s87, %s88
    %p92 = pneg %p86
    %p93 = scmp.eq.s32.totalorder %s9, 1
    %p94 = por %p92, %p93
    %p95 = scmp.ne.s32.totalorder %s87, %s90
    %p96 = scmp.eq.s32.totalorder %s9, 0
    %p97 = por %p95, %p96
    %p98 = scmp.ne.s32.totalorder %s87, %s90
    %p99 = scmp.eq.s32.totalorder %s14, 1
    %p100 = por %p98, %p99
    %p101 = scmp.ne.s32.totalorder %s90, %s91
    %p102 = scmp.eq.s32.totalorder %s14, 0
    %p103 = por %p101, %p102
    %p104 = scmp.ne.s32.totalorder %s90, %s91
    %p105 = scmp.eq.s32.totalorder %s15, 1
    %p106 = por %p104, %p105
    %p108 = scmp.ne.s32.totalorder %s91, %s107
    %p109 = scmp.eq.s32.totalorder %s15, 0
    %p110 = por %p108, %p109
    %p111 = scmp.le.s32.totalorder 1, %s9
    %p112 = scmp.lt.s32.totalorder %s9, 3
    %p113 = pnand %p111, %p112
    %p114 = pneg %p113
    // Predicated region
    $region9: #{tpu_custom_call.1} parent=5 // pred_check
      _
    $region10: #{tpu_custom_call.1} parent=5 // pred_check_branch
      %116 = sbr.rel (%p113) target = $region12
    $region11: #{tpu_custom_call.1} parent=5 // pred_region
      %s117 = ssub.s32 %s9, 1
      // Predicated region
      $region13: #{tpu_custom_call.1} parent=11 // pred_check
        %p118 = pneg %p56
      $region14: #{tpu_custom_call.1} parent=11 // pred_check_branch
        %120 = sbr.rel (%p118) target = $region16
      $region15: #{tpu_custom_call.1} parent=11 // pred_region
        _
      $region16: #{tpu_custom_call.1} parent=11 // pred_fallthru
        _
      // Predicated region
      $region17: #{tpu_custom_call.1} parent=11 // pred_check
        %p121 = pneg %p77
      $region18: #{tpu_custom_call.1} parent=11 // pred_check_branch
        %123 = sbr.rel (%p121) target = $region20
      $region19: #{tpu_custom_call.1} parent=11 // pred_region
        _
      $region20: #{tpu_custom_call.1} parent=11 // pred_fallthru
        _
    $region12: #{tpu_custom_call.1} parent=5 // pred_fallthru
      _
    %p124 = scmp.lt.s32.totalorder %s9, 2
    // Predicated region
    $region21: #{tpu_custom_call.1} parent=5 // pred_check
      %p125 = pneg %p124
    $region22: #{tpu_custom_call.1} parent=5 // pred_check_branch
      %127 = sbr.rel (%p125) target = $region24
    $region23: #{tpu_custom_call.1} parent=5 // pred_region
      // Predicated region
      $region25: #{tpu_custom_call.1} parent=23 // pred_check
        %p128 = pneg %p29
      $region26: #{tpu_custom_call.1} parent=23 // pred_check_branch
        %130 = sbr.rel (%p128) target = $region28
      $region27: #{tpu_custom_call.1} parent=23 // pred_region
        %s131 = smul.u32 2, %s9
        %p132 = scmp.lt.s32.totalorder %s131, 3
        %s133 = scalar_select %p132, %s131, 3
        %s134 = smul.addr %s133, 7
        %s135 = smul.addr %s134, 8
        %s136 = scalar_lea.vmem %s0, %s135
        %s137 = smul.u32 2, %s9
      $region28: #{tpu_custom_call.1} parent=23 // pred_fallthru
        _
    $region24: #{tpu_custom_call.1} parent=5 // pred_fallthru
      _
    %p138 = scmp.le.s32.totalorder 1, %s9
    %p139 = scmp.lt.s32.totalorder %s9, 3
    %p140 = pnand %p138, %p139
    %p141 = pneg %p140
    // Predicated region
    $region29: #{tpu_custom_call.1} parent=5 // pred_check
      _
    $region30: #{tpu_custom_call.1} parent=5 // pred_check_branch
      %143 = sbr.rel (%p140) target = $region32
    $region31: #{tpu_custom_call.1} parent=5 // pred_region
      %s144 = ssub.s32 %s9, 1
      %s145 = smul.u32 2, %s14
      %p146 = scmp.lt.s32.totalorder %s145, 3
      %s147 = scalar_select %p146, %s145, 3
      %s148 = smul.addr %s147, 7
      %s149 = smul.addr %s148, 8
      %s150 = scalar_lea.vmem %s0, %s149
      %p151 = pneg %p35
      %p152 = pneg %p32
      %p153 = pneg %p56
      %p154 = pneg %p53
      %p155 = pneg %p77
      %p156 = pneg %p74
      %p157 = pneg %p103
      %p158 = pneg %p100
      %s159 = smul.u32 2, %s14
      %p160 = scmp.lt.s32.totalorder %s159, 3
      %s161 = scalar_select %p160, %s159, 3
      %s162 = smul.addr %s161, 7
      %s163 = smul.addr %s162, 8
      %s164 = scalar_lea.vmem %s3, %s163
      %s165 = smul.u32 2, %s14
      %p166 = scmp.lt.s32.totalorder %s165, 3
      %s167 = scalar_select %p166, %s165, 3
      %s168 = smul.addr %s167, 7
      %s169 = smul.addr %s168, 8
      %s170 = scalar_lea.vmem %s0, %s169
      %s171 = smul.u32 2, %s14
      %s172 = smul.u32 2, %s14
      %p173 = scmp.lt.s32.totalorder %s172, 3
      %s174 = scalar_select %p173, %s172, 3
      %s175 = smul.addr %s174, 7
      %s176 = smul.addr %s175, 8
      %s177 = scalar_lea.vmem %s3, %s176
      %s178 = smul.u32 2, %s14
      %v179 = vld [vmem:[%s170] sm:$0xff]
      %v180 = vld [vmem:[%s170 + $0x8] sm:$0xff]
      %v181 = vld [vmem:[%s170 + $0x10] sm:$0xff]
      %v182 = vld [vmem:[%s170 + $0x18] sm:$0xff]
      %v183 = vld [vmem:[%s170 + $0x20] sm:$0xff]
      %v184 = vld [vmem:[%s170 + $0x28] sm:$0xff]
      %v185 = vld [vmem:[%s170 + $0x30] sm:$0x1]
      %v186 = vld [vmem:[%s170 + $0x38] sm:$0xff]
      %v187 = vld [vmem:[%s170 + $0x40] sm:$0xff]
      %v188 = vld [vmem:[%s170 + $0x48] sm:$0xff]
      %v189 = vld [vmem:[%s170 + $0x50] sm:$0xff]
      %v190 = vld [vmem:[%s170 + $0x58] sm:$0xff]
      %v191 = vld [vmem:[%s170 + $0x60] sm:$0xff]
      %v192 = vld [vmem:[%s170 + $0x68] sm:$0x1]
      %vm193 = vcmask 64512
      %v194 = vsel %vm193, %v179, 0.0
      %v195 = vsel %vm193, %v180, 0.0
      %v196 = vadd.f32 %v194, %v195
      %v197 = vsel %vm193, %v181, 0.0
      %v198 = vadd.f32 %v196, %v197
      %v199 = vsel %vm193, %v182, 0.0
      %v200 = vadd.f32 %v198, %v199
      %v201 = vsel %vm193, %v183, 0.0
      %v202 = vadd.f32 %v200, %v201
      %v203 = vsel %vm193, %v184, 0.0
      %v204 = vadd.f32 %v202, %v203
      %vm205 = vcmask 57344
      %v206 = vsel %vm205, %v185, 0.0
      %v207 = vadd.f32 %v204, %v206
      %v208 = vrot.slane %v207, 4
      %v209 = vadd.f32 %v207, %v208
      %v210 = vrot.slane %v209, 2
      %v211 = vadd.f32 %v209, %v210
      %v212 = vrot.slane %v211, 1
      %v213 = vadd.f32 %v211, %v212
      %v214 = vsel %vm193, %v186, 0.0
      %v215 = vsel %vm193, %v187, 0.0
      %v216 = vadd.f32 %v214, %v215
      %v217 = vsel %vm193, %v188, 0.0
      %v218 = vadd.f32 %v216, %v217
      %v219 = vsel %vm193, %v189, 0.0
      %v220 = vadd.f32 %v218, %v219
      %v221 = vsel %vm193, %v190, 0.0
      %v222 = vadd.f32 %v220, %v221
      %v223 = vsel %vm193, %v191, 0.0
      %v224 = vadd.f32 %v222, %v223
      %v225 = vsel %vm205, %v192, 0.0
      %v226 = vadd.f32 %v224, %v225
      %v227 = vrot.slane %v226, 4
      %v228 = vadd.f32 %v226, %v227
      %v229 = vrot.slane %v228, 2
      %v230 = vadd.f32 %v228, %v229
      %v231 = vrot.slane %v230, 1
      %v232 = vadd.f32 %v230, %v231
      %v233 = vmul.f32 %v213, 0.020408163
      %v234 = vmul.f32 %v232, 0.020408163
      %v235 = vsel %vm193, %v179, -inf
      %v236 = vsel %vm193, %v180, -inf
      %v237 = vsel %vm193, %v181, -inf
      %v238 = vmax.f32 %v235, %v237
      %v239 = vsel %vm193, %v182, -inf
      %v240 = vmax.f32 %v236, %v239
      %v241 = vsel %vm193, %v183, -inf
      %v242 = vmax.f32 %v238, %v241
      %v243 = vsel %vm193, %v184, -inf
      %v244 = vmax.f32 %v240, %v243
      %v245 = vsel %vm205, %v185, -inf
      %v246 = vmax.f32 %v242, %v245
      %v247 = vmax.f32 %v246, %v244
      %v248 = vrot.slane %v247, 4
      %v249 = vmax.f32 %v247, %v248
      %v250 = vrot.slane %v249, 2
      %v251 = vmax.f32 %v249, %v250
      %v252 = vrot.slane %v251, 1
      %v253 = vmax.f32 %v251, %v252
      %v254 = vsel %vm193, %v186, -inf
      %v255 = vsel %vm193, %v187, -inf
      %v256 = vsel %vm193, %v188, -inf
      %v257 = vmax.f32 %v254, %v256
      %v258 = vsel %vm193, %v189, -inf
      %v259 = vmax.f32 %v255, %v258
      %v260 = vsel %vm193, %v190, -inf
      %v261 = vmax.f32 %v257, %v260
      %v262 = vsel %vm193, %v191, -inf
      %v263 = vmax.f32 %v259, %v262
      %v264 = vsel %vm205, %v192, -inf
      %v265 = vmax.f32 %v261, %v264
      %v266 = vmax.f32 %v265, %v263
      %v267 = vrot.slane %v266, 4
      %v268 = vmax.f32 %v266, %v267
      %v269 = vrot.slane %v268, 2
      %v270 = vmax.f32 %v268, %v269
      %v271 = vrot.slane %v270, 1
      %v272 = vmax.f32 %v270, %v271
      %vm275 = vcmask 1041409
      %v276 = vsel %vm275, %v234, %v233
      %vm280 = vcmask 1043459
      %v281 = vsel %vm280, %v272, %v253
      %vm283 = vcmask 1041408
      %v284 = vsel %vm283, %v276, %v281
      %v285 = vld [vmem:[%s1] sm:$0xff]
      %v287 = vsel %vm193, %v284, 0
      %289 = vmatprep.subr.mxu0 0.0
      %290 = vmatpush1.msra.mxu0 %v285
      %291 = vmatprep.subr.mxu0 0.0
      %292 = vmatpush1.msra.mxu0 0.0
      %293 = vmatprep.subr.mxu0 0.0
      %294 = vmatpush1.msra.mxu0 0.0
      %295 = vmatprep.subr.mxu0 0.0
      %296 = vmatpush1.msra.mxu0 0.0
      %297 = vmatprep.subr.mxu0 0.0
      %298 = vmatpush1.msra.mxu0 0.0
      %299 = vmatprep.subr.mxu0 0.0
      %300 = vmatpush1.msra.mxu0 0.0
      %301 = vmatprep.subr.mxu0 0.0
      %302 = vmatpush1.msra.mxu0 0.0
      %303 = vmatprep.subr.mxu0 0.0
      %304 = vmatpush1.msra.mxu0 0.0
      %305 = vmatprep.subr.mxu0 0.0
      %306 = vmatpush1.msra.mxu0 0.0
      %307 = vmatprep.subr.mxu0 0.0
      %308 = vmatpush1.msra.mxu0 0.0
      %309 = vmatprep.subr.mxu0 0.0
      %310 = vmatpush1.msra.mxu0 0.0
      %311 = vmatprep.subr.mxu0 0.0
      %312 = vmatpush1.msra.mxu0 0.0
      %313 = vmatprep.subr.mxu0 0.0
      %314 = vmatpush1.msra.mxu0 0.0
      %315 = vmatprep.subr.mxu0 0.0
      %316 = vmatpush1.msra.mxu0 0.0
      %317 = vmatprep.subr.mxu0 0.0
      %318 = vmatpush1.msra.mxu0 0.0
      %319 = vmatprep.subr.mxu0 0.0
      %320 = vmatpush1.msra.mxu0 0.0
      %321 = vmatprep.subr.mxu0 0.0
      %322 = vmatpush1.msra.mxu0 0.0
      %323 = vmatprep.subr.mxu0 0.0
      %324 = vmatpush1.msra.mxu0 0.0
      %325 = vmatprep.subr.mxu0 0.0
      %326 = vmatpush1.msra.mxu0 0.0
      %327 = vmatprep.subr.mxu0 0.0
      %328 = vmatpush1.msra.mxu0 0.0
      %329 = vmatprep.subr.mxu0 0.0
      %330 = vmatpush1.msra.mxu0 0.0
      %331 = vmatprep.subr.mxu0 0.0
      %332 = vmatpush1.msra.mxu0 0.0
      %333 = vmatprep.subr.mxu0 0.0
      %334 = vmatpush1.msra.mxu0 0.0
      %335 = vmatprep.subr.mxu0 0.0
      %336 = vmatpush1.msra.mxu0 0.0
      %337 = vmatprep.subr.mxu0 0.0
      %338 = vmatpush1.msra.mxu0 0.0
      %339 = vmatprep.subr.mxu0 0.0
      %340 = vmatpush1.msra.mxu0 0.0
      %341 = vmatprep.subr.mxu0 0.0
      %342 = vmatpush1.msra.mxu0 0.0
      %343 = vmatprep.subr.mxu0 0.0
      %344 = vmatpush1.msra.mxu0 0.0
      %345 = vmatprep.subr.mxu0 0.0
      %346 = vmatpush1.msra.mxu0 0.0
      %347 = vmatprep.subr.mxu0 0.0
      %348 = vmatpush1.msra.mxu0 0.0
      %349 = vmatprep.subr.mxu0 0.0
      %350 = vmatpush1.msra.mxu0 0.0
      %351 = vmatprep.subr.mxu0 0.0
      %352 = vmatpush1.msra.mxu0 0.0
      %353 = vmatprep.mubr.f32.mxu0 0.0
      %354 = vmatmul.mubr.f32.gmra.mrb[0].mxu0 %v287
      %v355 = vpop.f32.mrb[0].mxu0
      %v356 = vadd.f32 0.0, %v355
      %v357 = vpop.f32.mrb[0].mxu0
      %358 = vdwg.mxu0
      %v359 = vmax.f32 %v356, 0.0
      %v360 = vld [vmem:[%s2] sm:$0xff]
      %v362 = vsel %vm193, %v359, 0
      %364 = vmatprep.subr.mxu0 0.0
      %365 = vmatpush1.msra.mxu0 %v360
      %366 = vmatprep.subr.mxu0 0.0
      %367 = vmatpush1.msra.mxu0 0.0
      %368 = vmatprep.subr.mxu0 0.0
      %369 = vmatpush1.msra.mxu0 0.0
      %370 = vmatprep.subr.mxu0 0.0
      %371 = vmatpush1.msra.mxu0 0.0
      %372 = vmatprep.subr.mxu0 0.0
      %373 = vmatpush1.msra.mxu0 0.0
      %374 = vmatprep.subr.mxu0 0.0
      %375 = vmatpush1.msra.mxu0 0.0
      %376 = vmatprep.subr.mxu0 0.0
      %377 = vmatpush1.msra.mxu0 0.0
      %378 = vmatprep.subr.mxu0 0.0
      %379 = vmatpush1.msra.mxu0 0.0
      %380 = vmatprep.subr.mxu0 0.0
      %381 = vmatpush1.msra.mxu0 0.0
      %382 = vmatprep.subr.mxu0 0.0
      %383 = vmatpush1.msra.mxu0 0.0
      %384 = vmatprep.subr.mxu0 0.0
      %385 = vmatpush1.msra.mxu0 0.0
      %386 = vmatprep.subr.mxu0 0.0
      %387 = vmatpush1.msra.mxu0 0.0
      %388 = vmatprep.subr.mxu0 0.0
      %389 = vmatpush1.msra.mxu0 0.0
      %390 = vmatprep.subr.mxu0 0.0
      %391 = vmatpush1.msra.mxu0 0.0
      %392 = vmatprep.subr.mxu0 0.0
      %393 = vmatpush1.msra.mxu0 0.0
      %394 = vmatprep.subr.mxu0 0.0
      %395 = vmatpush1.msra.mxu0 0.0
      %396 = vmatprep.subr.mxu0 0.0
      %397 = vmatpush1.msra.mxu0 0.0
      %398 = vmatprep.subr.mxu0 0.0
      %399 = vmatpush1.msra.mxu0 0.0
      %400 = vmatprep.subr.mxu0 0.0
      %401 = vmatpush1.msra.mxu0 0.0
      %402 = vmatprep.subr.mxu0 0.0
      %403 = vmatpush1.msra.mxu0 0.0
      %404 = vmatprep.subr.mxu0 0.0
      %405 = vmatpush1.msra.mxu0 0.0
      %406 = vmatprep.subr.mxu0 0.0
      %407 = vmatpush1.msra.mxu0 0.0
      %408 = vmatprep.subr.mxu0 0.0
      %409 = vmatpush1.msra.mxu0 0.0
      %410 = vmatprep.subr.mxu0 0.0
      %411 = vmatpush1.msra.mxu0 0.0
      %412 = vmatprep.subr.mxu0 0.0
      %413 = vmatpush1.msra.mxu0 0.0
      %414 = vmatprep.subr.mxu0 0.0
      %415 = vmatpush1.msra.mxu0 0.0
      %416 = vmatprep.subr.mxu0 0.0
      %417 = vmatpush1.msra.mxu0 0.0
      %418 = vmatprep.subr.mxu0 0.0
      %419 = vmatpush1.msra.mxu0 0.0
      %420 = vmatprep.subr.mxu0 0.0
      %421 = vmatpush1.msra.mxu0 0.0
      %422 = vmatprep.subr.mxu0 0.0
      %423 = vmatpush1.msra.mxu0 0.0
      %424 = vmatprep.subr.mxu0 0.0
      %425 = vmatpush1.msra.mxu0 0.0
      %426 = vmatprep.subr.mxu0 0.0
      %427 = vmatpush1.msra.mxu0 0.0
      %428 = vmatprep.mubr.f32.mxu0 0.0
      %429 = vmatmul.mubr.f32.gmra.mrb[0].mxu0 %v362
      %v430 = vpop.f32.mrb[0].mxu0
      %v431 = vadd.f32 0.0, %v430
      %v432 = vpop.f32.mrb[0].mxu0
      %433 = vdwg.mxu0
      %v434 = vxor.u32 %v431, 2147483648
      %v435 = vmul.f32 %v434, 1.442695
      %v436 = vpow.pop %v435
      %v437 = vadd.f32 %v436, 1.0
      %v438 = vrcp.pop %v437
      %v439 = vmul.f32 1.0, %v438
      %v441 = vrot.slane %v439, 2
      %v443 = vadd.f32 %v439, %v441
      %v446 = vunpack.c.l.s4 1966171168
      %v447 = vunpack.c.0.s8 %v446
      %v448 = vlaneseq
      %v449 = vshrl.u32 %v448, 7
      %v450 = vsub.s32 %v447, %v449
      %v451 = vrot.slane %v443, %v450
      %v452 = vcombine.high %v451, %v451
      %v454 = vunpack.c.l.s4 1966171168
      %v455 = vunpack.c.0.s8 %v454
      %v456 = vlaneseq
      %v457 = vshrl.u32 %v456, 7
      %v458 = vsub.s32 %v455, %v457
      %v459 = vrot.slane %v451, %v458
      %v461 = vunpack.c.l.s4 1966171168
      %v462 = vunpack.c.0.s8 %v461
      %v463 = vlaneseq
      %v464 = vshrl.u32 %v463, 7
      %v465 = vsub.s32 %v462, %v464
      %v466 = vrot.slane %v452, %v465
      %v467 = vlaneseq
      %v468 = vshrl.u32 %v467, 7
      %v469 = vsub.s32 0, %v468
      %v470 = vrot.slane %v459, %v469
      %v471 = vlaneseq
      %v472 = vshrl.u32 %v471, 7
      %v473 = vsub.s32 0, %v472
      %v474 = vrot.slane %v466, %v473
      %v477 = vmul.f32 %v179, %v470
      %v478 = vmul.f32 %v180, %v470
      %v479 = vmul.f32 %v181, %v470
      %v480 = vmul.f32 %v182, %v470
      %v481 = vmul.f32 %v183, %v470
      %v482 = vmul.f32 %v184, %v470
      %v483 = vmul.f32 %v185, %v470
      %v484 = vmul.f32 %v186, %v474
      %v485 = vmul.f32 %v187, %v474
      %v486 = vmul.f32 %v188, %v474
      %v487 = vmul.f32 %v189, %v474
      %v488 = vmul.f32 %v190, %v474
      %v489 = vmul.f32 %v191, %v474
      %v490 = vmul.f32 %v192, %v474
      %491 = vst.msk [vmem:[%s177] sm:$0xff] %vm193, %v477
      %492 = vst.msk [vmem:[%s177 + $0x8] sm:$0xff] %vm193, %v478
      %493 = vst.msk [vmem:[%s177 + $0x10] sm:$0xff] %vm193, %v479
      %494 = vst.msk [vmem:[%s177 + $0x18] sm:$0xff] %vm193, %v480
      %495 = vst.msk [vmem:[%s177 + $0x20] sm:$0xff] %vm193, %v481
      %496 = vst.msk [vmem:[%s177 + $0x28] sm:$0xff] %vm193, %v482
      %497 = vst.msk [vmem:[%s177 + $0x30] sm:$0x1] %vm205, %v483
      %498 = vst.msk [vmem:[%s177 + $0x38] sm:$0xff] %vm193, %v484
      %499 = vst.msk [vmem:[%s177 + $0x40] sm:$0xff] %vm193, %v485
      %500 = vst.msk [vmem:[%s177 + $0x48] sm:$0xff] %vm193, %v486
      %501 = vst.msk [vmem:[%s177 + $0x50] sm:$0xff] %vm193, %v487
      %502 = vst.msk [vmem:[%s177 + $0x58] sm:$0xff] %vm193, %v488
      %503 = vst.msk [vmem:[%s177 + $0x60] sm:$0xff] %vm193, %v489
      %504 = vst.msk [vmem:[%s177 + $0x68] sm:$0x1] %vm205, %v490
      %s505 = smul.u32 2, %s14
      %p506 = scmp.lt.s32.totalorder %s505, 3
      %s507 = scalar_select %p506, %s505, 3
      %s508 = smul.addr %s507, 7
      %s509 = smul.addr %s508, 8
      %s510 = scalar_lea.vmem %s3, %s509
      // Predicated region
      $region33: #{tpu_custom_call.1} parent=31 // pred_check
        %p511 = pneg %p100
      $region34: #{tpu_custom_call.1} parent=31 // pred_check_branch
        %513 = sbr.rel (%p511) target = $region36
      $region35: #{tpu_custom_call.1} parent=31 // pred_region
        %s514 = smul.u32 2, %s14
      $region36: #{tpu_custom_call.1} parent=31 // pred_fallthru
        _
    $region32: #{tpu_custom_call.1} parent=5 // pred_fallthru
      _
    %p515 = scmp.le.s32.totalorder 2, %s9
    // Predicated region
    $region37: #{tpu_custom_call.1} parent=5 // pred_check
      %p516 = pneg %p515
    $region38: #{tpu_custom_call.1} parent=5 // pred_check_branch
      %518 = sbr.rel (%p516) target = $region40
    $region39: #{tpu_custom_call.1} parent=5 // pred_region
      %s519 = ssub.s32 %s9, 2
      // Predicated region
      $region41: #{tpu_custom_call.1} parent=39 // pred_check
        %p520 = pneg %p106
      $region42: #{tpu_custom_call.1} parent=39 // pred_check_branch
        %522 = sbr.rel (%p520) target = $region44
      $region43: #{tpu_custom_call.1} parent=39 // pred_region
        %s523 = smul.u32 2, %s15
        %p524 = scmp.lt.s32.totalorder %s523, 3
        %s525 = scalar_select %p524, %s523, 3
        %s526 = smul.addr %s525, 7
        %s527 = smul.addr %s526, 8
        %s528 = scalar_lea.vmem %s3, %s527
      $region44: #{tpu_custom_call.1} parent=39 // pred_fallthru
        _
    $region40: #{tpu_custom_call.1} parent=5 // pred_fallthru
      _
  $region6: #{tpu_custom_call.1} parent=0 // loop_footer
    %s13 = sadd.s32 1, %s9
  $region7: #{tpu_custom_call.1} parent=0 // loop_footer_branch
    %8 = sbr.rel target = $region3
  $region8: #{tpu_custom_call.1} parent=0 // loop_exit
    _

</llo_original>
